<compile_context>
chip_gen: v5e
topology: v5e:2x2
jax: 0.10.0
libtpu: 0.0.40
codegen_flags: <defaults>
</compile_context>

<pallas_src>
import functools

import jax
import jax.numpy as jnp
from jax import lax
from jax.experimental import pallas as pl
from jax.experimental.pallas import tpu as pltpu


def _dsconv_kernel(xblk_ref, xhbm_ref, dww_ref, pww_ref, pwb_ref, o_ref,
                   lw_ref, rw_ref, sem_ref, *, K, TL, pad_l, pad_r):
    b = pl.program_id(0)
    i = pl.program_id(1)
    n_l = pl.num_programs(1)
    Cin = xblk_ref.shape[2]
    TLi = TL - (K - 1)                      # interior (halo-free) output rows
    f32 = jnp.float32

    # -- 1. issue the tiny halo DMAs FIRST; they complete under the interior
    #       compute and are only waited on right before the boundary rows. ----
    if pad_l > 0:
        @pl.when(i > 0)
        def _():
            start = i * TL - pad_l
            pltpu.make_async_copy(xhbm_ref.at[b, pl.ds(start, pad_l), :],
                                  lw_ref.at[0:pad_l, :], sem_ref.at[0]).start()

        @pl.when(i == 0)
        def _():   # 'same' padding: zero left halo at the start of the sequence
            lw_ref[0:pad_l, :] = jnp.zeros((pad_l, Cin), lw_ref.dtype)

    if pad_r > 0:
        @pl.when(i < n_l - 1)
        def _():
            start = (i + 1) * TL
            pltpu.make_async_copy(xhbm_ref.at[b, pl.ds(start, pad_r), :],
                                  rw_ref.at[K - 1:K - 1 + pad_r, :],
                                  sem_ref.at[1]).start()

        @pl.when(i == n_l - 1)
        def _():   # zero right halo at the end of the sequence
            rw_ref[K - 1:K - 1 + pad_r, :] = jnp.zeros((pad_r, Cin), rw_ref.dtype)

    # -- 2. stage the K-1 block rows each boundary window needs (tiny copies,
    #       disjoint from the DMA target rows). -------------------------------
    if pad_l > 0:
        lw_ref[pad_l:pad_l + K - 1, :] = xblk_ref[0, 0:K - 1, :]
    if pad_r > 0:
        rw_ref[0:K - 1, :] = xblk_ref[0, TL - (K - 1):TL, :]

    dww = dww_ref[...].astype(f32)          # (K, Cin)     hoisted once per step
    pww = pww_ref[...]                      # (Cin, Cout_e) MXU feed dtype
    pwb = pwb_ref[...].astype(f32)          # (1, Cout_e)  dw bias already folded
    mxu_dt = pww.dtype

    # -- 3. interior rows: depthwise taps straight off the pipelined block (no
    #       VMEM->VMEM window copy), f32 accumulation, then the pointwise 1x1
    #       conv as one MXU matmul with f32 accumulation. ---------------------
    acc = xblk_ref[0, 0:TLi, :].astype(f32) * dww[0:1, :]
    for k in range(1, K):                   # static shifted slices per tap
        acc = acc + xblk_ref[0, k:k + TLi, :].astype(f32) * dww[k:k + 1, :]
    out_m = jnp.dot(acc.astype(mxu_dt), pww, preferred_element_type=f32) + pwb
    o_ref[0, pad_l:pad_l + TLi, :] = out_m.astype(o_ref.dtype)

    # -- 4. boundary rows ('same' padding): wait for the halos (already in
    #       flight for the whole interior compute), recompute the first pad_l /
    #       last pad_r rows from the small windows, patch the output. ---------
    if pad_l > 0:
        @pl.when(i > 0)
        def _():
            pltpu.make_async_copy(
                xhbm_ref.at[b, pl.ds(i * TL - pad_l, pad_l), :],
                lw_ref.at[0:pad_l, :], sem_ref.at[0]).wait()

        acc_l = lw_ref[0:pad_l, :].astype(f32) * dww[0:1, :]
        for k in range(1, K):
            acc_l = acc_l + lw_ref[k:k + pad_l, :].astype(f32) * dww[k:k + 1, :]
        out_l = jnp.dot(acc_l.astype(mxu_dt), pww, preferred_element_type=f32) + pwb
        o_ref[0, 0:pad_l, :] = out_l.astype(o_ref.dtype)

    if pad_r > 0:
        @pl.when(i < n_l - 1)
        def _():
            pltpu.make_async_copy(
                xhbm_ref.at[b, pl.ds((i + 1) * TL, pad_r), :],
                rw_ref.at[K - 1:K - 1 + pad_r, :], sem_ref.at[1]).wait()

        acc_r = rw_ref[0:pad_r, :].astype(f32) * dww[0:1, :]
        for k in range(1, K):
            acc_r = acc_r + rw_ref[k:k + pad_r, :].astype(f32) * dww[k:k + 1, :]
        out_r = jnp.dot(acc_r.astype(mxu_dt), pww, preferred_element_type=f32) + pwb
        o_ref[0, TL - pad_r:TL, :] = out_r.astype(o_ref.dtype)


def _vmem_capacity_bytes():
    """Per-TensorCore VMEM capacity; conservative 64 MiB (v7x) fallback."""
    try:
        info = pltpu.get_tpu_info()
        cap = getattr(info, "vmem_capacity_bytes", None)
        if cap:
            return int(cap)
    except Exception:
        pass
    return 64 * 1024 * 1024


def _choose_tile_l(L, Cin, Cout_e, K, x_itemsize, w_itemsize, packing,
                   budget_bytes, max_tile=2048):
    """Largest L tile that divides L, respects sublane packing, fits the budget."""
    def vmem_est(tl):
        xblk = 2 * tl * Cin * x_itemsize                      # 2 pipeline buffers
        oblk = 2 * tl * Cout_e * x_itemsize                   # 2 pipeline buffers
        consts = 2 * (K * Cin + Cin * Cout_e + Cout_e) * w_itemsize  # dw/pw/bias
        windows = 2 * (2 * (K - 1) + 2) * Cin * x_itemsize    # boundary scratches
        work = 2 * tl * Cin * 4 + tl * Cout_e * 4             # f32 acc / result
        return xblk + oblk + consts + windows + work

    if L <= max_tile and vmem_est(L) <= budget_bytes:
        return L
    t0 = (min(max_tile, L) // packing) * packing
    for tl in range(t0, packing - 1, -packing):
        if L % tl == 0 and tl >= K and vmem_est(tl) <= budget_bytes:
            return tl
    # TODO(synk): ragged last tile (L with no suitable divisor) not handled;
    # falls back to a single full-L tile which may exceed the VMEM budget.
    return L


def dsconv(x, dw_w, dw_b, pw_w, pw_b, *, kernel_size, stride=1, tile_l=None,
           mxu_dtype=None):
    """x: (B, L, C_in) -> (B, L, C_out).  stride == 1 ('same' padding) path."""
    assert stride == 1, "only the stride==1 branch of DSconv is implemented"
    # TODO(synk): stride >= 2 branch (strided depthwise conv) not implemented.
    B, L, Cin = x.shape
    K = kernel_size
    Cout = pw_w.shape[1]
    pad_l = (K - 1) // 2                  # matches PyTorch padding='same', stride=1
    pad_r = (K - 1) - pad_l
    assert L >= K, "sequence shorter than the depthwise kernel is unsupported"

    # Fold the depthwise bias into the pointwise bias (the 1x1 conv is linear):
    #   pw(dw(x) + b_dw) + b_pw == pw(dw(x)) + (b_dw @ W_pw + b_pw)
    pwb_eff = pw_b + dw_b @ pw_w                                 # (Cout,)
    if mxu_dtype is not None:              # e.g. jnp.bfloat16 feed on v6e/v7x
        pw_w = pw_w.astype(mxu_dtype)

    # Lane-density: only pad Cout to a multiple of 128 when the extra HBM
    # writeback stays small (<= 12.5%); for small Cout a masked vst is far
    # cheaper than 8x write amplification plus a wrapper slice pass.
    pad_c = (-Cout) % 128
    if pad_c > 0 and pad_c * 8 <= Cout + pad_c:
        pw_w = jnp.pad(pw_w, ((0, 0), (0, pad_c)))
        pwb_eff = jnp.pad(pwb_eff, ((0, pad_c),))
        Cout_e = Cout + pad_c
    else:
        Cout_e = Cout
    pwb_2d = pwb_eff[None, :].astype(jnp.float32)                # (1, Cout_e)

    x_itemsize = jnp.dtype(x.dtype).itemsize
    w_itemsize = jnp.dtype(pw_w.dtype).itemsize
    packing = max(8, 32 // x_itemsize)     # sublane packing: f32 8, bf16 16, int8 32

    vmem_cap = _vmem_capacity_bytes()
    budget = max(16 * 1024 * 1024, int(vmem_cap * 0.55))
    vmem_limit = max(32 * 1024 * 1024, int(vmem_cap * 0.75))

    if tile_l is None:
        tile_l = _choose_tile_l(L, Cin, Cout_e, K, x_itemsize, w_itemsize,
                                packing, budget)
    TL = tile_l
    assert L % TL == 0 and (TL % packing == 0 or TL == L), (L, TL, packing)
    assert TL >= K, "L tile too small for the depthwise kernel"
    nL = L // TL

    kern = functools.partial(_dsconv_kernel, K=K, TL=TL, pad_l=pad_l, pad_r=pad_r)
    out = pl.pallas_call(
        kern,
        out_shape=jax.ShapeDtypeStruct((B, L, Cout_e), x.dtype),
        grid_spec=pltpu.PrefetchScalarGridSpec(
            num_scalar_prefetch=0,
            grid=(B, nL),
            in_specs=[
                # main L tile — auto-pipelined / double-buffered by BlockSpec
                pl.BlockSpec((1, TL, Cin), lambda b, i: (b, i, 0)),
                # same x, left in HBM, for the tiny async halo DMAs
                pl.BlockSpec(memory_space=pl.ANY),
                # weights/bias are grid-invariant; kept on default buffering for
                # compile safety — the VMEM estimate above counts 2 buffers.
                pl.BlockSpec((K, Cin), lambda b, i: (0, 0)),         # dw weight
                pl.BlockSpec((Cin, Cout_e), lambda b, i: (0, 0)),    # pw weight
                pl.BlockSpec((1, Cout_e), lambda b, i: (0, 0)),      # fused bias
            ],
            out_specs=pl.BlockSpec((1, TL, Cout_e), lambda b, i: (b, i, 0)),
            scratch_shapes=[
                pltpu.VMEM((max(pad_l, 1) + K - 1, Cin), x.dtype),   # left window
                pltpu.VMEM((K - 1 + max(pad_r, 1), Cin), x.dtype),   # right window
                pltpu.SemaphoreType.DMA((2,)),                       # halo DMA sems
            ],
        ),
        compiler_params=pltpu.CompilerParams(
            dimension_semantics=("parallel", "parallel"),
            vmem_limit_bytes=vmem_limit,
        ),
    )(x, x, dw_w, pw_w, pwb_2d)

    if Cout_e != Cout:
        out = out[..., :Cout]
    return out


def dsconv_ref(x, dw_w, dw_b, pw_w, pw_b, *, kernel_size):
    """Pure-JAX reference mirroring the PyTorch forward (NCL conv internally)."""
    B, L, Cin = x.shape
    K = kernel_size
    pad_l = (K - 1) // 2
    pad_r = (K - 1) - pad_l
    x_ncl = jnp.transpose(x, (0, 2, 1))                     # B C L
    w_dw = jnp.transpose(dw_w)[:, None, :]                  # (Cin, 1, K)
    y = lax.conv_general_dilated(
        x_ncl, w_dw, window_strides=(1,), padding=[(pad_l, pad_r)],
        feature_group_count=Cin, dimension_numbers=("NCH", "OIH", "NCH"))
    y = y + dw_b[:, None]
    out = jnp.einsum("bcl,co->bol", y, pw_w) + pw_b[:, None]
    return jnp.transpose(out, (0, 2, 1))                    # B L C_out


if __name__ == "__main__":
    B, L, Cin, Cout, K = 2, 32, 32, 16, 3

    key = jax.random.PRNGKey(0)
    k1, k2, k3, k4, k5 = jax.random.split(key, 5)
    x = jax.random.normal(k1, (B, L, Cin), jnp.float32)
    dw_w = jax.random.normal(k2, (K, Cin), jnp.float32) * 0.2
    dw_b = jax.random.normal(k3, (Cin,), jnp.float32) * 0.1
    pw_w = jax.random.normal(k4, (Cin, Cout), jnp.float32) * 0.2
    pw_b = jax.random.normal(k5, (Cout,), jnp.float32) * 0.1

    ref = dsconv_ref(x, dw_w, dw_b, pw_w, pw_b, kernel_size=K)

    # Default tiling (single L tile for this small shape).
    out1 = jax.block_until_ready(
        dsconv(x, dw_w, dw_b, pw_w, pw_b, kernel_size=K, stride=1))
    # Forced small L tiles: exercises the async halo DMAs + boundary patching.
    out2 = jax.block_until_ready(
        dsconv(x, dw_w, dw_b, pw_w, pw_b, kernel_size=K, stride=1, tile_l=8))

    assert out1.shape == (B, L, Cout), out1.shape
    assert out2.shape == (B, L, Cout), out2.shape
    err1 = float(jnp.max(jnp.abs(out1 - ref)))
    err2 = float(jnp.max(jnp.abs(out2 - ref)))
    assert jnp.allclose(out1, ref, atol=1e-3, rtol=1e-3), err1
    assert jnp.allclose(out2, ref, atol=1e-3, rtol=1e-3), err2
    print("KERNEL_OK")
</pallas_src>

<mosaic_0001>
module attributes {stable_mosaic.version = 11 : i64} {
  func.func @_dsconv_kernel(%arg0: i32, %arg1: i32, %arg2: memref<1x32x32xf32, #tpu.memory_space<vmem>>, %arg3: memref<2x32x32xf32, #tpu.memory_space<any>>, %arg4: memref<3x32xf32, #tpu.memory_space<vmem>>, %arg5: memref<32x16xf32, #tpu.memory_space<vmem>>, %arg6: memref<1x16xf32, #tpu.memory_space<vmem>>, %arg7: memref<1x32x16xf32, #tpu.memory_space<vmem>>, %arg8: memref<3x32xf32, #tpu.memory_space<vmem>>, %arg9: memref<3x32xf32, #tpu.memory_space<vmem>>, %arg10: memref<2x!tpu.dma_semaphore, #tpu.memory_space<semaphore_mem>>) attributes {dimension_semantics = [#tpu.dimension_semantics<parallel>, #tpu.dimension_semantics<parallel>], iteration_bounds = array<i64: 2, 1>, scalar_prefetch = 0 : i64, scratch_operands = 3 : i64, tpu.core_type = #tpu.core_type<tc>, window_params = [{transform_indices = @transform_0, window_bounds = array<i64: 1, 32, 32>}, {}, {pipeline_mode = #tpu.pipeline_mode<synchronous>, transform_indices = @transform_2, window_bounds = array<i64: 3, 32>}, {pipeline_mode = #tpu.pipeline_mode<synchronous>, transform_indices = @transform_3, window_bounds = array<i64: 32, 16>}, {pipeline_mode = #tpu.pipeline_mode<synchronous>, transform_indices = @transform_4, window_bounds = array<i64: 1, 16>}, {transform_indices = @transform_5, window_bounds = array<i64: 1, 32, 16>}]} {
    %c0_i32 = arith.constant 0 : i32
    %0 = arith.cmpi sgt, %arg1, %c0_i32 : i32
    %1 = arith.extui %0 : i1 to i32
    %c0_i32_0 = arith.constant 0 : i32
    %2 = arith.cmpi ne, %1, %c0_i32_0 : i32
    scf.if %2 {
      %c32_i32 = arith.constant 32 : i32
      %82 = arith.muli %arg1, %c32_i32 : i32
      %c1_i32 = arith.constant 1 : i32
      %83 = arith.subi %82, %c1_i32 : i32
      %c0_i32_54 = arith.constant 0 : i32
      %c0_i32_55 = arith.constant 0 : i32
      %84 = tpu.memref_slice %arg3[%arg0, %83, %c0_i32_55] : memref<2x32x32xf32, #tpu.memory_space<any>> -> memref<1x1x32xf32, #tpu.memory_space<any>>
      %85 = tpu.memref_squeeze %84 : memref<1x1x32xf32, #tpu.memory_space<any>> -> memref<1x32xf32, #tpu.memory_space<any>>
      %c0_i32_56 = arith.constant 0 : i32
      %c0_i32_57 = arith.constant 0 : i32
      %86 = tpu.memref_slice %arg8[%c0_i32_56, %c0_i32_57] : memref<3x32xf32, #tpu.memory_space<vmem>> -> memref<1x32xf32, #tpu.memory_space<vmem>>
      %87 = tpu.memref_slice %arg10[%c0_i32_54] : memref<2x!tpu.dma_semaphore, #tpu.memory_space<semaphore_mem>> -> memref<1x!tpu.dma_semaphore, #tpu.memory_space<semaphore_mem>>
      %88 = tpu.memref_squeeze %87 : memref<1x!tpu.dma_semaphore, #tpu.memory_space<semaphore_mem>> -> memref<!tpu.dma_semaphore, #tpu.memory_space<semaphore_mem>>
      tpu.enqueue_dma source(%85 : memref<1x32xf32, #tpu.memory_space<any>>) target(%86 : memref<1x32xf32, #tpu.memory_space<vmem>>) target_semaphore(%88 : memref<!tpu.dma_semaphore, #tpu.memory_space<semaphore_mem>>)
    } else {
    }
    %c0_i32_1 = arith.constant 0 : i32
    %3 = arith.cmpi eq, %arg1, %c0_i32_1 : i32
    %4 = arith.extui %3 : i1 to i32
    %c0_i32_2 = arith.constant 0 : i32
    %5 = arith.cmpi ne, %4, %c0_i32_2 : i32
    scf.if %5 {
      %cst_54 = arith.constant 0.000000e+00 : f32
      %82 = vector.broadcast %cst_54 : f32 to vector<1x32xf32>
      %c0_55 = arith.constant 0 : index
      %c0_56 = arith.constant 0 : index
      %83 = vector.load %arg8[%c0_55, %c0_56] : memref<3x32xf32, #tpu.memory_space<vmem>>, vector<1x32xf32>
      tpu.vector_store %arg8[%c0_55, %c0_56], %82 {strides = array<i32>} : memref<3x32xf32, #tpu.memory_space<vmem>>, vector<1x32xf32>,
    } else {
    }
    %c0_i32_3 = arith.constant 0 : i32
    %6 = arith.cmpi slt, %arg1, %c0_i32_3 : i32
    %7 = arith.extui %6 : i1 to i32
    %c0_i32_4 = arith.constant 0 : i32
    %8 = arith.cmpi ne, %7, %c0_i32_4 : i32
    scf.if %8 {
      %c1_i32 = arith.constant 1 : i32
      %82 = arith.addi %arg1, %c1_i32 : i32
      %c32_i32 = arith.constant 32 : i32
      %83 = arith.muli %82, %c32_i32 : i32
      %c1_i32_54 = arith.constant 1 : i32
      %c0_i32_55 = arith.constant 0 : i32
      %84 = tpu.memref_slice %arg3[%arg0, %83, %c0_i32_55] : memref<2x32x32xf32, #tpu.memory_space<any>> -> memref<1x1x32xf32, #tpu.memory_space<any>>
      %85 = tpu.memref_squeeze %84 : memref<1x1x32xf32, #tpu.memory_space<any>> -> memref<1x32xf32, #tpu.memory_space<any>>
      %c2_i32 = arith.constant 2 : i32
      %c0_i32_56 = arith.constant 0 : i32
      %86 = tpu.memref_slice %arg9[%c2_i32, %c0_i32_56] : memref<3x32xf32, #tpu.memory_space<vmem>> -> memref<1x32xf32, #tpu.memory_space<vmem>>
      %87 = tpu.memref_slice %arg10[%c1_i32_54] : memref<2x!tpu.dma_semaphore, #tpu.memory_space<semaphore_mem>> -> memref<1x!tpu.dma_semaphore, #tpu.memory_space<semaphore_mem>>
      %88 = tpu.memref_squeeze %87 : memref<1x!tpu.dma_semaphore, #tpu.memory_space<semaphore_mem>> -> memref<!tpu.dma_semaphore, #tpu.memory_space<semaphore_mem>>
      tpu.enqueue_dma source(%85 : memref<1x32xf32, #tpu.memory_space<any>>) target(%86 : memref<1x32xf32, #tpu.memory_space<vmem>>) target_semaphore(%88 : memref<!tpu.dma_semaphore, #tpu.memory_space<semaphore_mem>>)
    } else {
    }
    %c0_i32_5 = arith.constant 0 : i32
    %9 = arith.cmpi eq, %arg1, %c0_i32_5 : i32
    %10 = arith.extui %9 : i1 to i32
    %c0_i32_6 = arith.constant 0 : i32
    %11 = arith.cmpi ne, %10, %c0_i32_6 : i32
    scf.if %11 {
      %cst_54 = arith.constant 0.000000e+00 : f32
      %82 = vector.broadcast %cst_54 : f32 to vector<1x32xf32>
      %c2_55 = arith.constant 2 : index
      %c0_56 = arith.constant 0 : index
      %83 = vector.load %arg9[%c2_55, %c0_56] : memref<3x32xf32, #tpu.memory_space<vmem>>, vector<1x32xf32>
      tpu.vector_store %arg9[%c2_55, %c0_56], %82 {strides = array<i32>} : memref<3x32xf32, #tpu.memory_space<vmem>>, vector<1x32xf32>,
    } else {
    }
    %c0 = arith.constant 0 : index
    %c0_7 = arith.constant 0 : index
    %c0_8 = arith.constant 0 : index
    %12 = vector.load %arg2[%c0, %c0_7, %c0_8] : memref<1x32x32xf32, #tpu.memory_space<vmem>>, vector<1x2x32xf32>
    %13 = vector.shape_cast %12 : vector<1x2x32xf32> to vector<2x32xf32>
    %c1 = arith.constant 1 : index
    %c0_9 = arith.constant 0 : index
    %14 = vector.load %arg8[%c1, %c0_9] : memref<3x32xf32, #tpu.memory_space<vmem>>, vector<2x32xf32>
    tpu.vector_store %arg8[%c1, %c0_9], %13 {strides = array<i32>} : memref<3x32xf32, #tpu.memory_space<vmem>>, vector<2x32xf32>,
    %c0_10 = arith.constant 0 : index
    %c30 = arith.constant 30 : index
    %c0_11 = arith.constant 0 : index
    %15 = vector.load %arg2[%c0_10, %c30, %c0_11] : memref<1x32x32xf32, #tpu.memory_space<vmem>>, vector<1x2x32xf32>
    %16 = vector.shape_cast %15 : vector<1x2x32xf32> to vector<2x32xf32>
    %c0_12 = arith.constant 0 : index
    %c0_13 = arith.constant 0 : index
    %17 = vector.load %arg9[%c0_12, %c0_13] : memref<3x32xf32, #tpu.memory_space<vmem>>, vector<2x32xf32>
    tpu.vector_store %arg9[%c0_12, %c0_13], %16 {strides = array<i32>} : memref<3x32xf32, #tpu.memory_space<vmem>>, vector<2x32xf32>,
    %c0_14 = arith.constant 0 : index
    %c0_15 = arith.constant 0 : index
    %18 = vector.load %arg4[%c0_14, %c0_15] : memref<3x32xf32, #tpu.memory_space<vmem>>, vector<3x32xf32>
    %c0_16 = arith.constant 0 : index
    %c0_17 = arith.constant 0 : index
    %19 = vector.load %arg5[%c0_16, %c0_17] : memref<32x16xf32, #tpu.memory_space<vmem>>, vector<32x16xf32>
    %c0_18 = arith.constant 0 : index
    %c0_19 = arith.constant 0 : index
    %20 = vector.load %arg6[%c0_18, %c0_19] : memref<1x16xf32, #tpu.memory_space<vmem>>, vector<1x16xf32>
    %c0_20 = arith.constant 0 : index
    %c0_21 = arith.constant 0 : index
    %c0_22 = arith.constant 0 : index
    %21 = vector.load %arg2[%c0_20, %c0_21, %c0_22] : memref<1x32x32xf32, #tpu.memory_space<vmem>>, vector<1x30x32xf32>
    %22 = vector.shape_cast %21 : vector<1x30x32xf32> to vector<30x32xf32>
    %23 = vector.extract_strided_slice %18 {offsets = [0, 0], sizes = [1, 32], strides = [1, 1]} : vector<3x32xf32> to vector<1x32xf32>
    %24 = vector.broadcast %23 : vector<1x32xf32> to vector<30x32xf32>
    %25 = arith.mulf %22, %24 : vector<30x32xf32>
    %c0_23 = arith.constant 0 : index
    %c1_24 = arith.constant 1 : index
    %c0_25 = arith.constant 0 : index
    %26 = vector.load %arg2[%c0_23, %c1_24, %c0_25] : memref<1x32x32xf32, #tpu.memory_space<vmem>>, vector<1x30x32xf32>
    %27 = vector.shape_cast %26 : vector<1x30x32xf32> to vector<30x32xf32>
    %28 = vector.extract_strided_slice %18 {offsets = [1, 0], sizes = [1, 32], strides = [1, 1]} : vector<3x32xf32> to vector<1x32xf32>
    %29 = vector.broadcast %28 : vector<1x32xf32> to vector<30x32xf32>
    %30 = arith.mulf %27, %29 : vector<30x32xf32>
    %31 = arith.addf %25, %30 : vector<30x32xf32>
    %c0_26 = arith.constant 0 : index
    %c2 = arith.constant 2 : index
    %c0_27 = arith.constant 0 : index
    %32 = vector.load %arg2[%c0_26, %c2, %c0_27] : memref<1x32x32xf32, #tpu.memory_space<vmem>>, vector<1x30x32xf32>
    %33 = vector.shape_cast %32 : vector<1x30x32xf32> to vector<30x32xf32>
    %34 = vector.extract_strided_slice %18 {offsets = [2, 0], sizes = [1, 32], strides = [1, 1]} : vector<3x32xf32> to vector<1x32xf32>
    %35 = vector.broadcast %34 : vector<1x32xf32> to vector<30x32xf32>
    %36 = arith.mulf %33, %35 : vector<30x32xf32>
    %37 = arith.addf %31, %36 : vector<30x32xf32>
    %cst = arith.constant dense<0.000000e+00> : vector<30x16xf32>
    %38 = tpu.matmul %37, %19, %cst {dimension_numbers = #tpu.dot_dimension_numbers<[1], [0], [0], [1], [0, 0, 1, 1], [], []>} : vector<30x32xf32>, vector<32x16xf32>, vector<30x16xf32> -> vector<30x16xf32>
    %39 = vector.broadcast %20 : vector<1x16xf32> to vector<30x16xf32>
    %40 = arith.addf %38, %39 : vector<30x16xf32>
    %c0_28 = arith.constant 0 : index
    %c1_29 = arith.constant 1 : index
    %c0_30 = arith.constant 0 : index
    %41 = vector.load %arg7[%c0_28, %c1_29, %c0_30] : memref<1x32x16xf32, #tpu.memory_space<vmem>>, vector<1x30x16xf32>
    %42 = vector.shape_cast %41 : vector<1x30x16xf32> to vector<30x16xf32>
    %43 = vector.shape_cast %40 : vector<30x16xf32> to vector<1x30x16xf32>
    tpu.vector_store %arg7[%c0_28, %c1_29, %c0_30], %43 {strides = array<i32>} : memref<1x32x16xf32, #tpu.memory_space<vmem>>, vector<1x30x16xf32>,
    %c0_i32_31 = arith.constant 0 : i32
    %44 = arith.cmpi sgt, %arg1, %c0_i32_31 : i32
    %45 = arith.extui %44 : i1 to i32
    %c0_i32_32 = arith.constant 0 : i32
    %46 = arith.cmpi ne, %45, %c0_i32_32 : i32
    scf.if %46 {
      %c32_i32 = arith.constant 32 : i32
      %82 = arith.muli %arg1, %c32_i32 : i32
      %c1_i32 = arith.constant 1 : i32
      %83 = arith.subi %82, %c1_i32 : i32
      %c0_i32_54 = arith.constant 0 : i32
      %c0_i32_55 = arith.constant 0 : i32
      %84 = tpu.memref_slice %arg3[%arg0, %83, %c0_i32_55] : memref<2x32x32xf32, #tpu.memory_space<any>> -> memref<1x1x32xf32, #tpu.memory_space<any>>
      %85 = tpu.memref_squeeze %84 : memref<1x1x32xf32, #tpu.memory_space<any>> -> memref<1x32xf32, #tpu.memory_space<any>>
      %c0_i32_56 = arith.constant 0 : i32
      %c0_i32_57 = arith.constant 0 : i32
      %86 = tpu.memref_slice %arg8[%c0_i32_56, %c0_i32_57] : memref<3x32xf32, #tpu.memory_space<vmem>> -> memref<1x32xf32, #tpu.memory_space<vmem>>
      %87 = tpu.memref_slice %arg10[%c0_i32_54] : memref<2x!tpu.dma_semaphore, #tpu.memory_space<semaphore_mem>> -> memref<1x!tpu.dma_semaphore, #tpu.memory_space<semaphore_mem>>
      %88 = tpu.memref_squeeze %87 : memref<1x!tpu.dma_semaphore, #tpu.memory_space<semaphore_mem>> -> memref<!tpu.dma_semaphore, #tpu.memory_space<semaphore_mem>>
      tpu.wait_dma2 semaphore(%88 : memref<!tpu.dma_semaphore, #tpu.memory_space<semaphore_mem>>) src(%85 : memref<1x32xf32, #tpu.memory_space<any>>) dst(%86 : memref<1x32xf32, #tpu.memory_space<vmem>>)
    } else {
    }
    %c0_33 = arith.constant 0 : index
    %c0_34 = arith.constant 0 : index
    %47 = vector.load %arg8[%c0_33, %c0_34] : memref<3x32xf32, #tpu.memory_space<vmem>>, vector<1x32xf32>
    %48 = vector.extract_strided_slice %18 {offsets = [0, 0], sizes = [1, 32], strides = [1, 1]} : vector<3x32xf32> to vector<1x32xf32>
    %49 = arith.mulf %47, %48 : vector<1x32xf32>
    %c1_35 = arith.constant 1 : index
    %c0_36 = arith.constant 0 : index
    %50 = vector.load %arg8[%c1_35, %c0_36] : memref<3x32xf32, #tpu.memory_space<vmem>>, vector<1x32xf32>
    %51 = vector.extract_strided_slice %18 {offsets = [1, 0], sizes = [1, 32], strides = [1, 1]} : vector<3x32xf32> to vector<1x32xf32>
    %52 = arith.mulf %50, %51 : vector<1x32xf32>
    %53 = arith.addf %49, %52 : vector<1x32xf32>
    %c2_37 = arith.constant 2 : index
    %c0_38 = arith.constant 0 : index
    %54 = vector.load %arg8[%c2_37, %c0_38] : memref<3x32xf32, #tpu.memory_space<vmem>>, vector<1x32xf32>
    %55 = vector.extract_strided_slice %18 {offsets = [2, 0], sizes = [1, 32], strides = [1, 1]} : vector<3x32xf32> to vector<1x32xf32>
    %56 = arith.mulf %54, %55 : vector<1x32xf32>
    %57 = arith.addf %53, %56 : vector<1x32xf32>
    %cst_39 = arith.constant dense<0.000000e+00> : vector<1x16xf32>
    %58 = tpu.matmul %57, %19, %cst_39 {dimension_numbers = #tpu.dot_dimension_numbers<[1], [0], [0], [1], [0, 0, 1, 1], [], []>} : vector<1x32xf32>, vector<32x16xf32>, vector<1x16xf32> -> vector<1x16xf32>
    %59 = arith.addf %58, %20 : vector<1x16xf32>
    %c0_40 = arith.constant 0 : index
    %c0_41 = arith.constant 0 : index
    %c0_42 = arith.constant 0 : index
    %60 = vector.load %arg7[%c0_40, %c0_41, %c0_42] : memref<1x32x16xf32, #tpu.memory_space<vmem>>, vector<1x1x16xf32>
    %61 = vector.shape_cast %60 : vector<1x1x16xf32> to vector<1x16xf32>
    %62 = vector.shape_cast %59 : vector<1x16xf32> to vector<1x1x16xf32>
    tpu.vector_store %arg7[%c0_40, %c0_41, %c0_42], %62 {strides = array<i32>} : memref<1x32x16xf32, #tpu.memory_space<vmem>>, vector<1x1x16xf32>,
    %c0_i32_43 = arith.constant 0 : i32
    %63 = arith.cmpi slt, %arg1, %c0_i32_43 : i32
    %64 = arith.extui %63 : i1 to i32
    %c0_i32_44 = arith.constant 0 : i32
    %65 = arith.cmpi ne, %64, %c0_i32_44 : i32
    scf.if %65 {
      %c1_i32 = arith.constant 1 : i32
      %82 = arith.addi %arg1, %c1_i32 : i32
      %c32_i32 = arith.constant 32 : i32
      %83 = arith.muli %82, %c32_i32 : i32
      %c1_i32_54 = arith.constant 1 : i32
      %c0_i32_55 = arith.constant 0 : i32
      %84 = tpu.memref_slice %arg3[%arg0, %83, %c0_i32_55] : memref<2x32x32xf32, #tpu.memory_space<any>> -> memref<1x1x32xf32, #tpu.memory_space<any>>
      %85 = tpu.memref_squeeze %84 : memref<1x1x32xf32, #tpu.memory_space<any>> -> memref<1x32xf32, #tpu.memory_space<any>>
      %c2_i32 = arith.constant 2 : i32
      %c0_i32_56 = arith.constant 0 : i32
      %86 = tpu.memref_slice %arg9[%c2_i32, %c0_i32_56] : memref<3x32xf32, #tpu.memory_space<vmem>> -> memref<1x32xf32, #tpu.memory_space<vmem>>
      %87 = tpu.memref_slice %arg10[%c1_i32_54] : memref<2x!tpu.dma_semaphore, #tpu.memory_space<semaphore_mem>> -> memref<1x!tpu.dma_semaphore, #tpu.memory_space<semaphore_mem>>
      %88 = tpu.memref_squeeze %87 : memref<1x!tpu.dma_semaphore, #tpu.memory_space<semaphore_mem>> -> memref<!tpu.dma_semaphore, #tpu.memory_space<semaphore_mem>>
      tpu.wait_dma2 semaphore(%88 : memref<!tpu.dma_semaphore, #tpu.memory_space<semaphore_mem>>) src(%85 : memref<1x32xf32, #tpu.memory_space<any>>) dst(%86 : memref<1x32xf32, #tpu.memory_space<vmem>>)
    } else {
    }
    %c0_45 = arith.constant 0 : index
    %c0_46 = arith.constant 0 : index
    %66 = vector.load %arg9[%c0_45, %c0_46] : memref<3x32xf32, #tpu.memory_space<vmem>>, vector<1x32xf32>
    %67 = vector.extract_strided_slice %18 {offsets = [0, 0], sizes = [1, 32], strides = [1, 1]} : vector<3x32xf32> to vector<1x32xf32>
    %68 = arith.mulf %66, %67 : vector<1x32xf32>
    %c1_47 = arith.constant 1 : index
    %c0_48 = arith.constant 0 : index
    %69 = vector.load %arg9[%c1_47, %c0_48] : memref<3x32xf32, #tpu.memory_space<vmem>>, vector<1x32xf32>
    %70 = vector.extract_strided_slice %18 {offsets = [1, 0], sizes = [1, 32], strides = [1, 1]} : vector<3x32xf32> to vector<1x32xf32>
    %71 = arith.mulf %69, %70 : vector<1x32xf32>
    %72 = arith.addf %68, %71 : vector<1x32xf32>
    %c2_49 = arith.constant 2 : index
    %c0_50 = arith.constant 0 : index
    %73 = vector.load %arg9[%c2_49, %c0_50] : memref<3x32xf32, #tpu.memory_space<vmem>>, vector<1x32xf32>
    %74 = vector.extract_strided_slice %18 {offsets = [2, 0], sizes = [1, 32], strides = [1, 1]} : vector<3x32xf32> to vector<1x32xf32>
    %75 = arith.mulf %73, %74 : vector<1x32xf32>
    %76 = arith.addf %72, %75 : vector<1x32xf32>
    %cst_51 = arith.constant dense<0.000000e+00> : vector<1x16xf32>
    %77 = tpu.matmul %76, %19, %cst_51 {dimension_numbers = #tpu.dot_dimension_numbers<[1], [0], [0], [1], [0, 0, 1, 1], [], []>} : vector<1x32xf32>, vector<32x16xf32>, vector<1x16xf32> -> vector<1x16xf32>
    %78 = arith.addf %77, %20 : vector<1x16xf32>
    %c0_52 = arith.constant 0 : index
    %c31 = arith.constant 31 : index
    %c0_53 = arith.constant 0 : index
    %79 = vector.load %arg7[%c0_52, %c31, %c0_53] : memref<1x32x16xf32, #tpu.memory_space<vmem>>, vector<1x1x16xf32>
    %80 = vector.shape_cast %79 : vector<1x1x16xf32> to vector<1x16xf32>
    %81 = vector.shape_cast %78 : vector<1x16xf32> to vector<1x1x16xf32>
    tpu.vector_store %arg7[%c0_52, %c31, %c0_53], %81 {strides = array<i32>} : memref<1x32x16xf32, #tpu.memory_space<vmem>>, vector<1x1x16xf32>,
    return
  }
  func.func @transform_0(%arg0: i32, %arg1: i32) -> (i32, i32, i32) {
    %c0_i32 = arith.constant 0 : i32
    %c0_i32_0 = arith.constant 0 : i32
    return %arg0, %arg1, %c0_i32 : i32, i32, i32
  }
  func.func @transform_2(%arg0: i32, %arg1: i32) -> (i32, i32) {
    %c0_i32 = arith.constant 0 : i32
    %c0_i32_0 = arith.constant 0 : i32
    %c0_i32_1 = arith.constant 0 : i32
    return %c0_i32, %c0_i32_0 : i32, i32
  }
  func.func @transform_3(%arg0: i32, %arg1: i32) -> (i32, i32) {
    %c0_i32 = arith.constant 0 : i32
    %c0_i32_0 = arith.constant 0 : i32
    %c0_i32_1 = arith.constant 0 : i32
    return %c0_i32, %c0_i32_0 : i32, i32
  }
  func.func @transform_4(%arg0: i32, %arg1: i32) -> (i32, i32) {
    %c0_i32 = arith.constant 0 : i32
    %c0_i32_0 = arith.constant 0 : i32
    %c0_i32_1 = arith.constant 0 : i32
    return %c0_i32, %c0_i32_0 : i32, i32
  }
  func.func @transform_5(%arg0: i32, %arg1: i32) -> (i32, i32, i32) {
    %c0_i32 = arith.constant 0 : i32
    %c0_i32_0 = arith.constant 0 : i32
    return %arg0, %arg1, %c0_i32 : i32, i32, i32
  }
}

</mosaic_0001>

<llo_original>
// kernel: tpu_custom_call.1
$region0: #{tpu_custom_call.1}
  #allocation0 [shape = 'u32[]', space=smem, size = 0x4, offset = 0x4, fixed_abs, tag = 'smem constant byte address 0x4 - core index']
  #allocation1 [shape = 'u32[72,128]{1,0:T(1,128)}', space=vmem, size = 0x9000, scoped, tag = 'internal scratch']
  #allocation2 [shape = 'f32[3,32]{1,0:T(4,128)}', space=vmem, size = 0x800, scoped, tag = 'scratch operand']
  #allocation3 [shape = 'f32[3,32]{1,0:T(4,128)}', space=vmem, size = 0x800, scoped, tag = 'scratch operand']
  #allocation4 [shape = 's32[2]{0}', space=sflag, size = 0x8, scoped, tag = 'scratch operand']
  #allocation7 [shape = 's32[]', space=sflag, size = 0x4, offset = 0, fixed_abs, tag = 'sflag constant byte address 0x0 - dummy sync flag']
  #allocation8 [shape = 's32[]', space=sflag, size = 0x4, offset = 0, fixed_abs, tag = 'sflag constant byte address 0x0 - dummy sync flag']
  #allocation9 [shape = 'u32[]', space=smem, size = 0x4, offset = 0x44, fixed_abs, tag = 'smem constant byte address 0x44 - assertion arg 0']
  #allocation10 [shape = 'u32[]', space=smem, size = 0x4, offset = 0x48, fixed_abs, tag = 'smem constant byte address 0x48 - assertion arg 1']
  #allocation11 [shape = 's32[]', space=sflag, size = 0x4, offset = 0, fixed_abs, tag = 'sflag constant byte address 0x0 - dummy sync flag']
  #allocation12 [shape = 's32[]', space=sflag, size = 0x4, offset = 0, fixed_abs, tag = 'sflag constant byte address 0x0 - dummy sync flag']
  %s0 = inlined_call_operand.hbm [shape: f32[2,32,32], index: 0, kind: input, shape index: {}]
  %s1 = inlined_call_operand.hbm [shape: f32[2,32,32], index: 1, kind: input, shape index: {}]
  %s2 = inlined_call_operand.vmem [shape: f32[3,32], index: 2, kind: input, shape index: {}]
  %s3 = inlined_call_operand.vmem [shape: f32[32,16], index: 3, kind: input, shape index: {}]
  %s4 = inlined_call_operand.vmem [shape: f32[1,16], index: 4, kind: input, shape index: {}]
  %s5 = inlined_call_operand.vmem [shape: f32[2,32,16], index: 5, kind: output, shape index: {}]
  %s6 = sld [smem:[#allocation0]]
  $region85: #{tpu_custom_call.1} parent=0
    _
  %s8 = ssub.s32 1, %s6
  %s9 = scalar_select 0, %s8, %s6
  $region1: #{tpu_custom_call.1} parent=0
    #allocation5 [shape = 'u8[32768]{0}', space=vmem, size = 0x8000, scoped, tag = 'input window, operand 0']
    #allocation6 [shape = 's32[2]{0}', space=sflag, size = 0x8, scoped, tag = 'scoped memory for tpu_custom_call.1']
    %10 = vsyncpa [#allocation6], 0
    %s11 = scalar_lea.sflag [#allocation6], 1
    %12 = vsyncpa %s11, 0
    loop: start=0, step=1, limit=4
    $region2: #{tpu_custom_call.1} parent=1 // loop_pre_header
      _
    $region3: #{tpu_custom_call.1} parent=1 // loop_header
      %s14 = sphi 0, %s18
      %p15 = scmp.ge.s32.totalorder %s14, 4
      %s21 = sphi 0, %s33
      %s22 = sphi 0, %s29
      %s23 = sphi 0, %s21
      %s24 = sphi 0, %s22
      %s25 = sphi 0, %s23
      %s26 = sphi 0, %s24
      %s38 = sphi 0, %s40
      %s41 = sphi 0, %s38
      %s42 = sphi 0, %s41
      %s58 = sphi 0, %s42
      %s62 = sphi 0, %s62
      %s64 = sphi 0, %s62
      %s65 = sphi 0, %s64
      %s79 = sphi 0, %s65
      %s83 = sphi 0, %s83
      %s85 = sphi 0, %s83
      %s86 = sphi 0, %s85
      %s100 = sphi 0, %s86
      %s104 = sphi 0, %s104
      %s106 = sphi 0, %s104
      %s107 = sphi 0, %s106
      %s121 = sphi 0, %s107
      %s129 = sphi 0, %s131
      %s132 = sphi 0, %s129
      %s133 = sphi 0, %s132
      %s149 = sphi 0, %s133
    $region4: #{tpu_custom_call.1} parent=1 // loop_header_branch
      %17 = sbr.rel (%p15) target = $region8
    $region5: #{tpu_custom_call.1} parent=1 // loop_body
      %s19 = ssub.s32 %s14, 1
      %s20 = ssub.s32 %s14, 2
      %s27 = sadd.s32 1, %s22
      %p28 = scmp.ge.s32.totalorder %s27, 1
      %s29 = scalar_select %p28, 0, %s27
      %s30 = sadd.s32 1, %s21
      %s31 = scalar_select %p28, %s30, %s21
      %p32 = scmp.ge.s32.totalorder %s31, 2
      %s33 = scalar_select %p32, 0, %s31
      %s34 = ssub.s32 %s21, %s33
      %s35 = ssub.s32 %s22, %s29
      %s36 = sor.u32 %s34, %s35
      %p37 = scmp.eq.s32.totalorder %s36, 0
      %s39 = sadd.s32 %s38, 1
      %s40 = scalar_select %p37, %s38, %s39
      %p43 = pneg %p37
      %p44 = scmp.eq.s32.totalorder %s14, 1
      %p45 = por %p43, %p44
      %p46 = scmp.ne.s32.totalorder %s38, %s41
      %p47 = scmp.eq.s32.totalorder %s14, 0
      %p48 = por %p46, %p47
      %p49 = scmp.ne.s32.totalorder %s38, %s41
      %p50 = scmp.eq.s32.totalorder %s19, 1
      %p51 = por %p49, %p50
      %p52 = scmp.ne.s32.totalorder %s41, %s42
      %p53 = scmp.eq.s32.totalorder %s19, 0
      %p54 = por %p52, %p53
      %p55 = scmp.ne.s32.totalorder %s41, %s42
      %p56 = scmp.eq.s32.totalorder %s20, 1
      %p57 = por %p55, %p56
      %p59 = scmp.ne.s32.totalorder %s42, %s58
      %p60 = scmp.eq.s32.totalorder %s20, 0
      %p61 = por %p59, %p60
      %s63 = sadd.s32 %s62, 1
      %p66 = scmp.eq.s32.totalorder %s14, 1
      %p67 = scmp.ne.s32.totalorder %s62, %s64
      %p68 = scmp.eq.s32.totalorder %s14, 0
      %p69 = por %p67, %p68
      %p70 = scmp.ne.s32.totalorder %s62, %s64
      %p71 = scmp.eq.s32.totalorder %s19, 1
      %p72 = por %p70, %p71
      %p73 = scmp.ne.s32.totalorder %s64, %s65
      %p74 = scmp.eq.s32.totalorder %s19, 0
      %p75 = por %p73, %p74
      %p76 = scmp.ne.s32.totalorder %s64, %s65
      %p77 = scmp.eq.s32.totalorder %s20, 1
      %p78 = por %p76, %p77
      %p80 = scmp.ne.s32.totalorder %s65, %s79
      %p81 = scmp.eq.s32.totalorder %s20, 0
      %p82 = por %p80, %p81
      %s84 = sadd.s32 %s83, 1
      %p87 = scmp.eq.s32.totalorder %s14, 1
      %p88 = scmp.ne.s32.totalorder %s83, %s85
      %p89 = scmp.eq.s32.totalorder %s14, 0
      %p90 = por %p88, %p89
      %p91 = scmp.ne.s32.totalorder %s83, %s85
      %p92 = scmp.eq.s32.totalorder %s19, 1
      %p93 = por %p91, %p92
      %p94 = scmp.ne.s32.totalorder %s85, %s86
      %p95 = scmp.eq.s32.totalorder %s19, 0
      %p96 = por %p94, %p95
      %p97 = scmp.ne.s32.totalorder %s85, %s86
      %p98 = scmp.eq.s32.totalorder %s20, 1
      %p99 = por %p97, %p98
      %p101 = scmp.ne.s32.totalorder %s86, %s100
      %p102 = scmp.eq.s32.totalorder %s20, 0
      %p103 = por %p101, %p102
      %s105 = sadd.s32 %s104, 1
      %p108 = scmp.eq.s32.totalorder %s14, 1
      %p109 = scmp.ne.s32.totalorder %s104, %s106
      %p110 = scmp.eq.s32.totalorder %s14, 0
      %p111 = por %p109, %p110
      %p112 = scmp.ne.s32.totalorder %s104, %s106
      %p113 = scmp.eq.s32.totalorder %s19, 1
      %p114 = por %p112, %p113
      %p115 = scmp.ne.s32.totalorder %s106, %s107
      %p116 = scmp.eq.s32.totalorder %s19, 0
      %p117 = por %p115, %p116
      %p118 = scmp.ne.s32.totalorder %s106, %s107
      %p119 = scmp.eq.s32.totalorder %s20, 1
      %p120 = por %p118, %p119
      %p122 = scmp.ne.s32.totalorder %s107, %s121
      %p123 = scmp.eq.s32.totalorder %s20, 0
      %p124 = por %p122, %p123
      %s125 = ssub.s32 %s21, %s33
      %s126 = ssub.s32 %s22, %s29
      %s127 = sor.u32 %s125, %s126
      %p128 = scmp.eq.s32.totalorder %s127, 0
      %s130 = sadd.s32 %s129, 1
      %s131 = scalar_select %p128, %s129, %s130
      %p134 = pneg %p128
      %p135 = scmp.eq.s32.totalorder %s14, 1
      %p136 = por %p134, %p135
      %p137 = scmp.ne.s32.totalorder %s129, %s132
      %p138 = scmp.eq.s32.totalorder %s14, 0
      %p139 = por %p137, %p138
      %p140 = scmp.ne.s32.totalorder %s129, %s132
      %p141 = scmp.eq.s32.totalorder %s19, 1
      %p142 = por %p140, %p141
      %p143 = scmp.ne.s32.totalorder %s132, %s133
      %p144 = scmp.eq.s32.totalorder %s19, 0
      %p145 = por %p143, %p144
      %p146 = scmp.ne.s32.totalorder %s132, %s133
      %p147 = scmp.eq.s32.totalorder %s20, 1
      %p148 = por %p146, %p147
      %p150 = scmp.ne.s32.totalorder %s133, %s149
      %p151 = scmp.eq.s32.totalorder %s20, 0
      %p152 = por %p150, %p151
      %p153 = scmp.le.s32.totalorder 1, %s14
      %p154 = scmp.lt.s32.totalorder %s14, 3
      %p155 = pnand %p153, %p154
      %p156 = pneg %p155
      // Predicated region
      $region9: #{tpu_custom_call.1} parent=5 // pred_check
        _
      $region10: #{tpu_custom_call.1} parent=5 // pred_check_branch
        %158 = sbr.rel (%p155) target = $region12
      $region11: #{tpu_custom_call.1} parent=5 // pred_region
        %s159 = ssub.s32 %s14, 1
        // Predicated region
        $region13: #{tpu_custom_call.1} parent=11 // pred_check
          %p160 = pneg %p75
        $region14: #{tpu_custom_call.1} parent=11 // pred_check_branch
          %162 = sbr.rel (%p160) target = $region16
        $region15: #{tpu_custom_call.1} parent=11 // pred_region
          _
        $region16: #{tpu_custom_call.1} parent=11 // pred_fallthru
          _
        // Predicated region
        $region17: #{tpu_custom_call.1} parent=11 // pred_check
          %p163 = pneg %p96
        $region18: #{tpu_custom_call.1} parent=11 // pred_check_branch
          %165 = sbr.rel (%p163) target = $region20
        $region19: #{tpu_custom_call.1} parent=11 // pred_region
          _
        $region20: #{tpu_custom_call.1} parent=11 // pred_fallthru
          _
        // Predicated region
        $region21: #{tpu_custom_call.1} parent=11 // pred_check
          %p166 = pneg %p117
        $region22: #{tpu_custom_call.1} parent=11 // pred_check_branch
          %168 = sbr.rel (%p166) target = $region24
        $region23: #{tpu_custom_call.1} parent=11 // pred_region
          _
        $region24: #{tpu_custom_call.1} parent=11 // pred_fallthru
          _
      $region12: #{tpu_custom_call.1} parent=5 // pred_fallthru
        _
      %p169 = scmp.lt.s32.totalorder %s14, 2
      // Predicated region
      $region25: #{tpu_custom_call.1} parent=5 // pred_check
        %p170 = pneg %p169
      $region26: #{tpu_custom_call.1} parent=5 // pred_check_branch
        %172 = sbr.rel (%p170) target = $region28
      $region27: #{tpu_custom_call.1} parent=5 // pred_region
        // Predicated region
        $region29: #{tpu_custom_call.1} parent=27 // pred_check
          %p173 = pneg %p48
        $region30: #{tpu_custom_call.1} parent=27 // pred_check_branch
          %175 = sbr.rel (%p173) target = $region32
        $region31: #{tpu_custom_call.1} parent=27 // pred_region
          %s176 = sand.u32 %s38, 1
          %s177 = scalar_lea.sflag [#allocation6], %s176
          %s178 = sand.u32 %s38, 1
          %s179 = smul.addr %s178, 32
          %s180 = scalar_lea.vmem [#allocation5], %s179
          %s181 = smul.u32 4, %s22
          %183 = vsyncadd %s177, 0
          %s184 = smul.addr %s21, 4
          %s185 = sadd.s32 %s181, %s184
          %s186 = smul.addr %s185, 8
          %s187 = scalar_lea.hbm %s0, %s186
          %s188 = sshll.u32 %s187, 4
          %s189 = int_to_ptr.hbm [resolvable:$true] %s188
          %s190 = sshll.u32 %s180, 4
          %s191 = int_to_ptr.vmem [resolvable:$true] %s190
          %196 = dma.hbm_to_vmem [thread:$0]  %s189, 512, %s191, %s177, 128, 128, 8
        $region32: #{tpu_custom_call.1} parent=27 // pred_fallthru
          _
      $region28: #{tpu_custom_call.1} parent=5 // pred_fallthru
        _
      %p197 = scmp.le.s32.totalorder 1, %s14
      %p198 = scmp.lt.s32.totalorder %s14, 3
      %p199 = pnand %p197, %p198
      %p200 = pneg %p199
      // Predicated region
      $region33: #{tpu_custom_call.1} parent=5 // pred_check
        _
      $region34: #{tpu_custom_call.1} parent=5 // pred_check_branch
        %202 = sbr.rel (%p199) target = $region36
      $region35: #{tpu_custom_call.1} parent=5 // pred_region
        %s203 = ssub.s32 %s14, 1
        %s204 = sand.u32 %s41, 1
        %s205 = scalar_lea.sflag [#allocation6], %s204
        %s206 = sand.u32 %s41, 1
        %s207 = smul.addr %s206, 32
        %s208 = scalar_lea.vmem [#allocation5], %s207
        // Predicated region
        $region37: #{tpu_custom_call.1} parent=35 // pred_check
          %p209 = pneg %p54
        $region38: #{tpu_custom_call.1} parent=35 // pred_check_branch
          %211 = sbr.rel (%p209) target = $region40
        $region39: #{tpu_custom_call.1} parent=35 // pred_region
          %213 = dma.done %s205, 512
        $region40: #{tpu_custom_call.1} parent=35 // pred_fallthru
          _
        %s214 = sand.u32 %s41, 1
        %s215 = scalar_lea.sflag [#allocation6], %s214
        %s216 = sand.u32 %s41, 1
        %s217 = smul.addr %s216, 32
        %s218 = scalar_lea.vmem [#allocation5], %s217
        %p219 = pneg %p54
        %p220 = pneg %p51
        %p221 = pneg %p75
        %p222 = pneg %p72
        %p223 = pneg %p96
        %p224 = pneg %p93
        %p225 = pneg %p117
        %p226 = pneg %p114
        %p227 = pneg %p145
        %p228 = pneg %p142
        %s229 = smul.u32 4, %s24
        %p230 = scmp.lt.s32.totalorder %s23, 1
        %s231 = scalar_select %p230, %s23, 1
        %p232 = scmp.lt.s32.totalorder %s229, 3
        %s233 = scalar_select %p232, %s229, 3
        %s234 = smul.addr %s231, 4
        %s235 = sadd.s32 %s233, %s234
        %s236 = smul.addr %s235, 8
        %s237 = scalar_lea.vmem %s5, %s236
        %s238 = smul.u32 4, %s24
        %s239 = smul.u32 4, %s24
        %p240 = scmp.lt.s32.totalorder %s23, 1
        %s241 = scalar_select %p240, %s23, 1
        %p242 = scmp.lt.s32.totalorder %s239, 3
        %s243 = scalar_select %p242, %s239, 3
        %s244 = smul.addr %s241, 4
        %s245 = sadd.s32 %s243, %s244
        %s246 = smul.addr %s245, 8
        %s247 = scalar_lea.vmem %s5, %s246
        %s248 = smul.u32 4, %s24
        %p249 = scmp.gt.s32.totalorder %s24, 0
        // Predicated region
        $region41: #{tpu_custom_call.1} parent=35 // pred_check
          %p250 = pneg %p249
        $region42: #{tpu_custom_call.1} parent=35 // pred_check_branch
          %252 = sbr.rel (%p250) target = $region44
        $region43: #{tpu_custom_call.1} parent=35 // pred_region
          %s253 = smul.u32 %s24, 32
          %s254 = ssub.s32 %s253, 1
          %s255 = smul.u32 %s23, 32
          %s256 = sadd.s32 %s254, %s255
          %s257 = scalar_lea.hbm %s1, %s256
          // Predicated region
          $region45: #{tpu_custom_call.1} parent=43 // pred_check
            _
          $region46: #{tpu_custom_call.1} parent=43 // pred_check_branch
            %259 = sbr.rel target = $region48
          $region47: #{tpu_custom_call.1} parent=43 // pred_region
            %260 = sst [smem:[#allocation9]] [#allocation8]
            %261 = sst [smem:[#allocation10]] [#allocation7]
          $region48: #{tpu_custom_call.1} parent=43 // pred_fallthru
            _
          %263 = shalt.err (0)
          %s265 = sshll.u32 %s257, 4
          %s266 = int_to_ptr.hbm [resolvable:$true] %s265
          %s267 = sshll.u32 [#allocation2], 4
          %s268 = int_to_ptr.vmem [resolvable:$true] %s267
          %270 = dma.hbm_to_vmem [thread:$0]  %s266, 16, %s268, [#allocation4]
        $region44: #{tpu_custom_call.1} parent=35 // pred_fallthru
          _
        %p271 = scmp.eq.s32.totalorder %s24, 0
        // Predicated region
        $region49: #{tpu_custom_call.1} parent=35 // pred_check
          %p272 = pneg %p271
        $region50: #{tpu_custom_call.1} parent=35 // pred_check_branch
          %274 = sbr.rel (%p272) target = $region52
        $region51: #{tpu_custom_call.1} parent=35 // pred_region
          %vm275 = vcmask 253952
          %276 = vst.msk [vmem:[#allocation2] sm:$0x1] %vm275, 0.0
        $region52: #{tpu_custom_call.1} parent=35 // pred_fallthru
          _
        %p277 = scmp.lt.s32.totalorder %s24, 0
        // Predicated region
        $region53: #{tpu_custom_call.1} parent=35 // pred_check
          %p278 = pneg %p277
        $region54: #{tpu_custom_call.1} parent=35 // pred_check_branch
          %280 = sbr.rel (%p278) target = $region56
        $region55: #{tpu_custom_call.1} parent=35 // pred_region
          %s281 = sadd.s32 %s24, 1
          %s282 = smul.u32 %s281, 32
          %s283 = smul.u32 %s23, 32
          %s284 = sadd.s32 %s282, %s283
          %s285 = scalar_lea.hbm %s1, %s284
          %s286 = scalar_lea.vmem [#allocation3], 2
          %s287 = scalar_lea.sflag [#allocation4], 1
          // Predicated region
          $region57: #{tpu_custom_call.1} parent=55 // pred_check
            _
          $region58: #{tpu_custom_call.1} parent=55 // pred_check_branch
            %289 = sbr.rel target = $region60
          $region59: #{tpu_custom_call.1} parent=55 // pred_region
            %290 = sst [smem:[#allocation9]] [#allocation12]
            %291 = sst [smem:[#allocation10]] [#allocation11]
          $region60: #{tpu_custom_call.1} parent=55 // pred_fallthru
            _
          %293 = shalt.err (0)
          %s295 = sshll.u32 %s285, 4
          %s296 = int_to_ptr.hbm [resolvable:$true] %s295
          %s297 = sshll.u32 %s286, 4
          %s298 = int_to_ptr.vmem [resolvable:$true] %s297
          %300 = dma.hbm_to_vmem [thread:$0]  %s296, 16, %s298, %s287
        $region56: #{tpu_custom_call.1} parent=35 // pred_fallthru
          _
        // Predicated region
        $region61: #{tpu_custom_call.1} parent=35 // pred_check
          %p301 = pneg %p271
        $region62: #{tpu_custom_call.1} parent=35 // pred_check_branch
          %303 = sbr.rel (%p301) target = $region64
        $region63: #{tpu_custom_call.1} parent=35 // pred_region
          %vm304 = vcmask 253952
          %305 = vst.msk [vmem:[#allocation3 + $0x2] sm:$0x1] %vm304, 0.0
        $region64: #{tpu_custom_call.1} parent=35 // pred_fallthru
          _
        %v306 = vld [vmem:[%s208] sm:$0x3]
        %vm307 = vcmask 254976
        %308 = vst.msk [vmem:[#allocation2 + $0x1] sm:$0x3] %vm307, %v306
        %v309 = vld [vmem:[%s208 + $0x1e] sm:$0x3]
        %310 = vst.msk [vmem:[#allocation3] sm:$0x3] %vm307, %v309
        %v311 = vld [vmem:[%s2] sm:$0x7]
        %v312 = vld [vmem:[%s3] sm:$0xff]
        %v313 = vld [vmem:[%s3 + $0x8] sm:$0xff]
        %v314 = vld [vmem:[%s3 + $0x10] sm:$0xff]
        %v315 = vld [vmem:[%s3 + $0x18] sm:$0xff]
        %v316 = vld [vmem:[%s4] sm:$0x1]
        %v317 = vld [vmem:[%s208] sm:$0xff]
        %v318 = vld [vmem:[%s208 + $0x8] sm:$0xff]
        %v319 = vld [vmem:[%s208 + $0x10] sm:$0xff]
        %v320 = vld [vmem:[%s208 + $0x18] sm:$0x3f]
        %v321 = vperm.slane %v311, 0
        %v322 = vmul.f32 %v317, %v321
        %v323 = vmul.f32 %v318, %v321
        %v324 = vmul.f32 %v319, %v321
        %v325 = vmul.f32 %v320, %v321
        %v326 = vld [vmem:[%s208 + $0x1] sm:$0xff]
        %v327 = vld [vmem:[%s208 + $0x9] sm:$0xff]
        %v328 = vld [vmem:[%s208 + $0x11] sm:$0xff]
        %v329 = vld [vmem:[%s208 + $0x19] sm:$0x3f]
        %v330 = vperm.slane %v311, 1
        %v331 = vmul.f32 %v326, %v330
        %v332 = vmul.f32 %v327, %v330
        %v333 = vmul.f32 %v328, %v330
        %v334 = vmul.f32 %v329, %v330
        %v335 = vadd.f32 %v322, %v331
        %v336 = vadd.f32 %v323, %v332
        %v337 = vadd.f32 %v324, %v333
        %v338 = vadd.f32 %v325, %v334
        %v339 = vld [vmem:[%s208 + $0x2] sm:$0xff]
        %v340 = vld [vmem:[%s208 + $0xa] sm:$0xff]
        %v341 = vld [vmem:[%s208 + $0x12] sm:$0xff]
        %v342 = vld [vmem:[%s208 + $0x1a] sm:$0x3f]
        %v343 = vperm.slane %v311, 2
        %v344 = vmul.f32 %v339, %v343
        %v345 = vmul.f32 %v340, %v343
        %v346 = vmul.f32 %v341, %v343
        %v347 = vmul.f32 %v342, %v343
        %v348 = vadd.f32 %v335, %v344
        %v349 = vadd.f32 %v336, %v345
        %v350 = vadd.f32 %v337, %v346
        %v351 = vadd.f32 %v338, %v347
        %v353 = vperm.slane %v316, 0
        %vm355 = vcmask 261120
        %v357 = vsel %vm355, %v348, 0
        %v360 = vsel %vm355, %v349, 0
        %v363 = vsel %vm355, %v350, 0
        %v366 = vsel %vm355, %v351, 0
        %368 = vmatpush.msra.mxu0 0.0
        %369 = vmatpush.msra.mxu0 0.0
        %370 = vmatpush.msra.mxu0 0.0
        %371 = vmatpush.msra.mxu0 0.0
        %372 = vmatpush.msra.mxu0 0.0
        %373 = vmatpush.msra.mxu0 0.0
        %374 = vmatpush.msra.mxu0 0.0
        %375 = vmatpush.msra.mxu0 0.0
        %376 = vmatpush.msra.mxu0 0.0
        %377 = vmatpush.msra.mxu0 0.0
        %378 = vmatpush.msra.mxu0 0.0
        %379 = vmatpush.msra.mxu0 0.0
        %380 = vmatpush.msra.mxu0 %v315
        %381 = vmatpush.msra.mxu0 %v314
        %382 = vmatpush.msra.mxu0 %v313
        %383 = vmatpush.msra.mxu0 %v312
        %384 = vmatmul.f32.gmra.mxu0 %v357
        %v385 = vpop.f32.mrf.mxu0
        %v386 = vadd.f32 %v353, %v385
        %387 = vmatmul.f32.gmra.mxu0 %v360
        %v388 = vpop.f32.mrf.mxu0
        %v389 = vadd.f32 %v353, %v388
        %390 = vmatmul.f32.gmra.mxu0 %v363
        %v391 = vpop.f32.mrf.mxu0
        %v392 = vadd.f32 %v353, %v391
        %393 = vmatmul.f32.gmra.mxu0 %v366
        %v394 = vpop.f32.mrf.mxu0
        %v395 = vadd.f32 %v353, %v394
        %396 = vdwg.mxu0
        %vm397 = vcmask 130048
        %398 = vst.msk [vmem:[%s247 + $0x1] sm:$0xff] %vm397, %v386
        %399 = vst.msk [vmem:[%s247 + $0x9] sm:$0xff] %vm397, %v389
        %400 = vst.msk [vmem:[%s247 + $0x11] sm:$0xff] %vm397, %v392
        %vm401 = vcmask 128000
        %402 = vst.msk [vmem:[%s247 + $0x19] sm:$0x3f] %vm401, %v395
        // Predicated region
        $region65: #{tpu_custom_call.1} parent=35 // pred_check
          %p403 = pneg %p249
        $region66: #{tpu_custom_call.1} parent=35 // pred_check_branch
          %405 = sbr.rel (%p403) target = $region68
        $region67: #{tpu_custom_call.1} parent=35 // pred_region
          %s406 = smul.u32 1, 1
          %s407 = sshll.u32 %s406, 4
          %408 = dma.done [#allocation4], %s407
        $region68: #{tpu_custom_call.1} parent=35 // pred_fallthru
          _
        %v409 = vld [vmem:[#allocation2] sm:$0x1]
        %v410 = vmul.f32 %v409, %v311
        %v411 = vld [vmem:[#allocation2 + $0x1] sm:$0x1]
        %v413 = vrot.slane %v311, 1
        %v415 = vmul.f32 %v411, %v413
        %v416 = vadd.f32 %v410, %v415
        %v417 = vld [vmem:[#allocation2 + $0x2] sm:$0x1]
        %v418 = vrot.slane %v311, 2
        %v420 = vmul.f32 %v417, %v418
        %v421 = vadd.f32 %v416, %v420
        %v423 = vsel %vm355, %v421, 0
        %425 = vmatpush.msra.mxu0 0.0
        %426 = vmatpush.msra.mxu0 0.0
        %427 = vmatpush.msra.mxu0 0.0
        %428 = vmatpush.msra.mxu0 0.0
        %429 = vmatpush.msra.mxu0 0.0
        %430 = vmatpush.msra.mxu0 0.0
        %431 = vmatpush.msra.mxu0 0.0
        %432 = vmatpush.msra.mxu0 0.0
        %433 = vmatpush.msra.mxu0 0.0
        %434 = vmatpush.msra.mxu0 0.0
        %435 = vmatpush.msra.mxu0 0.0
        %436 = vmatpush.msra.mxu0 0.0
        %437 = vmatpush.msra.mxu0 %v315
        %438 = vmatpush.msra.mxu0 %v314
        %439 = vmatpush.msra.mxu0 %v313
        %440 = vmatpush.msra.mxu0 %v312
        %441 = vmatmul.f32.gmra.mxu0 %v423
        %v442 = vpop.f32.mrf.mxu0
        %v443 = vadd.f32 %v316, %v442
        %444 = vdwg.mxu0
        %vm445 = vcmask 122880
        %446 = vst.msk [vmem:[%s247] sm:$0x1] %vm445, %v443
        // Predicated region
        $region69: #{tpu_custom_call.1} parent=35 // pred_check
          %p447 = pneg %p277
        $region70: #{tpu_custom_call.1} parent=35 // pred_check_branch
          %449 = sbr.rel (%p447) target = $region72
        $region71: #{tpu_custom_call.1} parent=35 // pred_region
          %s450 = scalar_lea.sflag [#allocation4], 1
          %s451 = smul.u32 1, 1
          %s452 = sshll.u32 %s451, 4
          %453 = dma.done %s450, %s452
        $region72: #{tpu_custom_call.1} parent=35 // pred_fallthru
          _
        %v454 = vld [vmem:[#allocation3] sm:$0x1]
        %v455 = vmul.f32 %v454, %v311
        %v456 = vld [vmem:[#allocation3 + $0x1] sm:$0x1]
        %v457 = vmul.f32 %v456, %v413
        %v458 = vadd.f32 %v455, %v457
        %v459 = vld [vmem:[#allocation3 + $0x2] sm:$0x1]
        %v460 = vmul.f32 %v459, %v418
        %v461 = vadd.f32 %v458, %v460
        %v463 = vsel %vm355, %v461, 0
        %465 = vmatpush.msra.mxu0 0.0
        %466 = vmatpush.msra.mxu0 0.0
        %467 = vmatpush.msra.mxu0 0.0
        %468 = vmatpush.msra.mxu0 0.0
        %469 = vmatpush.msra.mxu0 0.0
        %470 = vmatpush.msra.mxu0 0.0
        %471 = vmatpush.msra.mxu0 0.0
        %472 = vmatpush.msra.mxu0 0.0
        %473 = vmatpush.msra.mxu0 0.0
        %474 = vmatpush.msra.mxu0 0.0
        %475 = vmatpush.msra.mxu0 0.0
        %476 = vmatpush.msra.mxu0 0.0
        %477 = vmatpush.msra.mxu0 %v315
        %478 = vmatpush.msra.mxu0 %v314
        %479 = vmatpush.msra.mxu0 %v313
        %480 = vmatpush.msra.mxu0 %v312
        %481 = vmatmul.f32.gmra.mxu0 %v463
        %v482 = vpop.f32.mrf.mxu0
        %v483 = vadd.f32 %v316, %v482
        %484 = vdwg.mxu0
        %485 = vst.msk [vmem:[%s247 + $0x1f] sm:$0x1] %vm445, %v483
        %s486 = smul.u32 4, %s24
        %p487 = scmp.lt.s32.totalorder %s23, 1
        %s488 = scalar_select %p487, %s23, 1
        %p489 = scmp.lt.s32.totalorder %s486, 3
        %s490 = scalar_select %p489, %s486, 3
        %s491 = smul.addr %s488, 4
        %s492 = sadd.s32 %s490, %s491
        %s493 = smul.addr %s492, 8
        %s494 = scalar_lea.vmem %s5, %s493
        // Predicated region
        $region73: #{tpu_custom_call.1} parent=35 // pred_check
          %p495 = pneg %p142
        $region74: #{tpu_custom_call.1} parent=35 // pred_check_branch
          %497 = sbr.rel (%p495) target = $region76
        $region75: #{tpu_custom_call.1} parent=35 // pred_region
          %s498 = smul.u32 4, %s24
        $region76: #{tpu_custom_call.1} parent=35 // pred_fallthru
          _
      $region36: #{tpu_custom_call.1} parent=5 // pred_fallthru
        _
      %p499 = scmp.le.s32.totalorder 2, %s14
      // Predicated region
      $region77: #{tpu_custom_call.1} parent=5 // pred_check
        %p500 = pneg %p499
      $region78: #{tpu_custom_call.1} parent=5 // pred_check_branch
        %502 = sbr.rel (%p500) target = $region80
      $region79: #{tpu_custom_call.1} parent=5 // pred_region
        %s503 = ssub.s32 %s14, 2
        // Predicated region
        $region81: #{tpu_custom_call.1} parent=79 // pred_check
          %p504 = pneg %p148
        $region82: #{tpu_custom_call.1} parent=79 // pred_check_branch
          %506 = sbr.rel (%p504) target = $region84
        $region83: #{tpu_custom_call.1} parent=79 // pred_region
          %s507 = smul.u32 4, %s26
          %p508 = scmp.lt.s32.totalorder %s25, 1
          %s509 = scalar_select %p508, %s25, 1
          %p510 = scmp.lt.s32.totalorder %s507, 3
          %s511 = scalar_select %p510, %s507, 3
          %s512 = smul.addr %s509, 4
          %s513 = sadd.s32 %s511, %s512
          %s514 = smul.addr %s513, 8
          %s515 = scalar_lea.vmem %s5, %s514
        $region84: #{tpu_custom_call.1} parent=79 // pred_fallthru
          _
      $region80: #{tpu_custom_call.1} parent=5 // pred_fallthru
        _
    $region6: #{tpu_custom_call.1} parent=1 // loop_footer
      %s18 = sadd.s32 1, %s14
    $region7: #{tpu_custom_call.1} parent=1 // loop_footer_branch
      %13 = sbr.rel target = $region3
    $region8: #{tpu_custom_call.1} parent=1 // loop_exit
      _
    %516 = vsyncpa [#allocation6], 1
    %s517 = scalar_lea.sflag [#allocation6], 1
    %518 = vsyncpa %s517, 1
  %519 = vsyncmov [#allocation4]
  %s520 = vpop.sfrf %519
  %p521 = scmp.eq.s32.totalorder %s520, 0
  %p522 = pneg %p521
  %524 = shalt.err (%p522)
  %s525 = scalar_lea.sflag [#allocation4], 1
  %526 = vsyncmov %s525
  %s527 = vpop.sfrf %526
  %p528 = scmp.eq.s32.totalorder %s527, 0
  %p529 = pneg %p528
  %531 = shalt.err (%p529)

</llo_original>
